<compile_context>
chip_gen: v6e
topology: v6e:2x2x1
jax: 0.10.0
libtpu: 0.0.40
codegen_flags: <defaults>
</compile_context>

<pallas_src>
import functools

import jax
import jax.numpy as jnp
from jax.experimental import pallas as pl
from jax.experimental.pallas import tpu as pltpu


def _rnn_seq_kernel(x_ref, h0_ref, wx_ref, wh_ref, g_ref, b_ref, o_ref, u_ref,
                    *, eps, layer_norm, unroll):
    """One grid step == the full sequence for one batch tile.

    x_ref:  (T, B_tile, I)   all timesteps of this batch tile
    h0_ref: (B_tile, H)      initial hidden
    wx_ref: (I, H)           input-projection weight     (resident)
    wh_ref: (H, H)           recurrent-projection weight (resident)
    g_ref:  (1, H)  b_ref: (1, H)   LayerNorm affine (or bias if LN disabled)
    o_ref:  (T, B_tile, H)   h_t for every step
    u_ref:  (T, B_tile, H)   f32 scratch: precomputed input projection
    """
    T, Bt, I = x_ref.shape
    H = wh_ref.shape[1]

    # Off-serial-path input projection for the whole (time x batch) tile:
    # one big (T*Bt, I) @ (I, H) MXU matmul instead of T small ones.
    x_all = x_ref[...].reshape(T * Bt, I).astype(wx_ref.dtype)
    u_ref[...] = jnp.dot(x_all, wx_ref[...],
                         preferred_element_type=jnp.float32).reshape(T, Bt, H)

    gamma = g_ref[...]        # (1, H) f32, resident in vregs
    beta = b_ref[...]

    def step(t, h):
        # Recurrent half on the serial path: (Bt, H) @ (H, H), f32 accum.
        z = u_ref[t] + jnp.dot(h.astype(wh_ref.dtype), wh_ref[...],
                               preferred_element_type=jnp.float32)
        if layer_norm:
            # PyTorch LayerNorm semantics: biased variance, eps inside rsqrt.
            mean = jnp.mean(z, axis=-1, keepdims=True)
            zc = z - mean
            var = jnp.mean(zc * zc, axis=-1, keepdims=True)
            h_new = jnp.tanh(zc * jax.lax.rsqrt(var + eps) * gamma + beta)
        else:
            # layer_norm_enabled=False: Linear has a bias (passed as `beta`).
            h_new = jnp.tanh(z + beta)
        o_ref[t] = h_new.astype(o_ref.dtype)
        return h_new

    h = h0_ref[...].astype(jnp.float32)
    if unroll:
        for t in range(T):            # T is static: full unroll, static indices
            h = step(t, h)
    else:
        jax.lax.fori_loop(0, T, step, h)


def layer_norm_rnn_sequence(x_seq, h0, w, gamma, beta, *, batch_tile=None,
                            matmul_dtype=None, eps=1e-5, layer_norm=True,
                            unroll=True):
    """Run the LayerNormRNNCell over a whole sequence in one pallas_call.

    x_seq: (T, B, I)   h0: (B, H)   w: (I+H, H)  (== nn.Linear.weight.T)
    gamma, beta: (H,)  (beta doubles as the Linear bias when layer_norm=False)
    returns: (T, B, H) -- h_t for every step.
    """
    T, B, I = x_seq.shape
    H = h0.shape[1]
    assert w.shape == (I + H, H)

    if batch_tile is None:
        batch_tile = B
    assert B % batch_tile == 0

    wdt = matmul_dtype if matmul_dtype is not None else jnp.float32
    wx = w[:I].astype(wdt)            # (I, H) input projection
    wh = w[I:].astype(wdt)            # (H, H) recurrent projection
    g2 = gamma.reshape(1, H).astype(jnp.float32)
    b2 = beta.reshape(1, H).astype(jnp.float32)

    kernel = functools.partial(_rnn_seq_kernel, eps=eps,
                               layer_norm=layer_norm, unroll=unroll)

    return pl.pallas_call(
        kernel,
        out_shape=jax.ShapeDtypeStruct((T, B, H), x_seq.dtype),
        grid_spec=pltpu.PrefetchScalarGridSpec(
            num_scalar_prefetch=0,
            grid=(B // batch_tile,),            # batch tiles, megacore-parallel
            in_specs=[
                # full sequence for this batch tile: DMA'd once per tile
                pl.BlockSpec((T, batch_tile, I), lambda b: (0, b, 0)),
                # initial hidden for this batch tile
                pl.BlockSpec((batch_tile, H), lambda b: (b, 0)),
                # resident weights / LN affine: constant block indices
                pl.BlockSpec((I, H), lambda b: (0, 0)),
                pl.BlockSpec((H, H), lambda b: (0, 0)),
                pl.BlockSpec((1, H), lambda b: (0, 0)),
                pl.BlockSpec((1, H), lambda b: (0, 0)),
            ],
            out_specs=pl.BlockSpec((T, batch_tile, H), lambda b: (0, b, 0)),
            # f32 buffer holding the precomputed input projection of the tile.
            scratch_shapes=[pltpu.VMEM((T, batch_tile, H), jnp.float32)],
        ),
        compiler_params=pltpu.CompilerParams(
            dimension_semantics=("parallel",),
        ),
    )(x_seq, h0, wx, wh, g2, b2)


def layer_norm_rnn_cell(x, h, w, gamma, beta, *, matmul_dtype=None, eps=1e-5,
                        layer_norm=True):
    """Single-step forward, exactly matching the PyTorch module's forward()."""
    out = layer_norm_rnn_sequence(x[None], h, w, gamma, beta,
                                  batch_tile=h.shape[0],
                                  matmul_dtype=matmul_dtype, eps=eps,
                                  layer_norm=layer_norm)
    return out[0]


# ----------------------------- pure-JAX reference ---------------------------

def _reference_cell(x, h, w, gamma, beta, eps=1e-5, layer_norm=True):
    z = jnp.concatenate([x, h], axis=1) @ w
    if not layer_norm:
        return jnp.tanh(z + beta)
    mean = jnp.mean(z, axis=-1, keepdims=True)
    var = jnp.mean((z - mean) ** 2, axis=-1, keepdims=True)
    return jnp.tanh((z - mean) * jax.lax.rsqrt(var + eps) * gamma + beta)


def _reference_seq(x_seq, h0, w, gamma, beta, eps=1e-5, layer_norm=True):
    def step(h, x_t):
        h_new = _reference_cell(x_t, h, w, gamma, beta, eps, layer_norm)
        return h_new, h_new
    _, hs = jax.lax.scan(step, h0, x_seq)
    return hs


if __name__ == "__main__":
    # Lane-dense small shapes: H = I = 128 (full 128-lane vregs, unmasked
    # stores), B = 16 split into two batch tiles of 8 sublanes, T = 16 steps.
    B, T, INPUT_SIZE, HIDDEN_SIZE = 16, 16, 128, 128

    key = jax.random.PRNGKey(0)
    kx, kh, kw, kb = jax.random.split(key, 4)

    x_seq = jax.random.normal(kx, (T, B, INPUT_SIZE), dtype=jnp.float32)
    h0 = jax.random.normal(kh, (B, HIDDEN_SIZE), dtype=jnp.float32)

    # nn.Linear(input_size + hidden_size, hidden_size, bias=False):
    # weight (H, I+H), uniform(-1/sqrt(fan_in), 1/sqrt(fan_in)) like PyTorch.
    fan_in = INPUT_SIZE + HIDDEN_SIZE
    bound = 1.0 / float(fan_in) ** 0.5
    w_torch = jax.random.uniform(kw, (HIDDEN_SIZE, fan_in), dtype=jnp.float32,
                                 minval=-bound, maxval=bound)
    w = w_torch.T                                  # (I+H, H) for [x|h] @ w

    # nn.LayerNorm(hidden_size) default init: gamma=1, beta=0.
    gamma = jnp.ones((HIDDEN_SIZE,), dtype=jnp.float32)
    beta = jnp.zeros((HIDDEN_SIZE,), dtype=jnp.float32)

    # 1) Single-step forward == the PyTorch module's forward(input, hidden).
    h1 = jax.block_until_ready(layer_norm_rnn_cell(x_seq[0], h0, w, gamma, beta))
    ref1 = _reference_cell(x_seq[0], h0, w, gamma, beta)
    assert h1.shape == (B, HIDDEN_SIZE)
    assert jnp.allclose(h1, ref1, atol=1e-4, rtol=1e-4)

    # 2) Loop-fused sequence: one pallas_call for all T steps, unrolled loop.
    hs = jax.block_until_ready(
        layer_norm_rnn_sequence(x_seq, h0, w, gamma, beta, batch_tile=8))
    ref_hs = _reference_seq(x_seq, h0, w, gamma, beta)
    assert hs.shape == (T, B, HIDDEN_SIZE)
    assert jnp.allclose(hs, ref_hs, atol=1e-4, rtol=1e-4)

    # 3) fori_loop fallback for long sequences gives the same result.
    hs2 = jax.block_until_ready(
        layer_norm_rnn_sequence(x_seq, h0, w, gamma, beta, batch_tile=8,
                                unroll=False))
    assert jnp.allclose(hs2, ref_hs, atol=1e-4, rtol=1e-4)

    # 4) layer_norm_enabled=False path: Linear has a bias, no LayerNorm.
    bias = 0.1 * jax.random.normal(kb, (HIDDEN_SIZE,), dtype=jnp.float32)
    hs3 = jax.block_until_ready(
        layer_norm_rnn_sequence(x_seq, h0, w, gamma, bias, batch_tile=8,
                                layer_norm=False))
    ref_hs3 = _reference_seq(x_seq, h0, w, gamma, bias, layer_norm=False)
    assert jnp.allclose(hs3, ref_hs3, atol=1e-4, rtol=1e-4)

    print("KERNEL_OK")
</pallas_src>

<mosaic_0001>
module attributes {stable_mosaic.version = 11 : i64} {
  func.func @_rnn_seq_kernel(%arg0: i32, %arg1: memref<1x16x128xf32, #tpu.memory_space<vmem>>, %arg2: memref<16x128xf32, #tpu.memory_space<vmem>>, %arg3: memref<128x128xf32, #tpu.memory_space<vmem>>, %arg4: memref<128x128xf32, #tpu.memory_space<vmem>>, %arg5: memref<1x128xf32, #tpu.memory_space<vmem>>, %arg6: memref<1x128xf32, #tpu.memory_space<vmem>>, %arg7: memref<1x16x128xf32, #tpu.memory_space<vmem>>, %arg8: memref<1x16x128xf32, #tpu.memory_space<vmem>>) attributes {dimension_semantics = [#tpu.dimension_semantics<parallel>], iteration_bounds = array<i64: 1>, scalar_prefetch = 0 : i64, scratch_operands = 1 : i64, tpu.core_type = #tpu.core_type<tc>, window_params = [{transform_indices = @transform_0, window_bounds = array<i64: 1, 16, 128>}, {transform_indices = @transform_1, window_bounds = array<i64: 16, 128>}, {pipeline_mode = #tpu.pipeline_mode<synchronous>, transform_indices = @transform_2, window_bounds = array<i64: 128, 128>}, {pipeline_mode = #tpu.pipeline_mode<synchronous>, transform_indices = @transform_3, window_bounds = array<i64: 128, 128>}, {pipeline_mode = #tpu.pipeline_mode<synchronous>, transform_indices = @transform_4, window_bounds = array<i64: 1, 128>}, {pipeline_mode = #tpu.pipeline_mode<synchronous>, transform_indices = @transform_5, window_bounds = array<i64: 1, 128>}, {transform_indices = @transform_6, window_bounds = array<i64: 1, 16, 128>}]} {
    %c0 = arith.constant 0 : index
    %c0_0 = arith.constant 0 : index
    %c0_1 = arith.constant 0 : index
    %0 = vector.load %arg1[%c0, %c0_0, %c0_1] : memref<1x16x128xf32, #tpu.memory_space<vmem>>, vector<1x16x128xf32>
    %1 = vector.shape_cast %0 : vector<1x16x128xf32> to vector<16x128xf32>
    %c0_2 = arith.constant 0 : index
    %c0_3 = arith.constant 0 : index
    %2 = vector.load %arg3[%c0_2, %c0_3] : memref<128x128xf32, #tpu.memory_space<vmem>>, vector<128x128xf32>
    %cst = arith.constant dense<0.000000e+00> : vector<16x128xf32>
    %3 = tpu.matmul %1, %2, %cst {dimension_numbers = #tpu.dot_dimension_numbers<[1], [0], [0], [1], [0, 0, 1, 1], [], []>} : vector<16x128xf32>, vector<128x128xf32>, vector<16x128xf32> -> vector<16x128xf32>
    %4 = vector.shape_cast %3 : vector<16x128xf32> to vector<1x16x128xf32>
    %c0_4 = arith.constant 0 : index
    %c0_5 = arith.constant 0 : index
    %c0_6 = arith.constant 0 : index
    %5 = vector.load %arg8[%c0_4, %c0_5, %c0_6] : memref<1x16x128xf32, #tpu.memory_space<vmem>>, vector<1x16x128xf32>
    tpu.vector_store %arg8[%c0_4, %c0_5, %c0_6], %4 {strides = array<i32>} : memref<1x16x128xf32, #tpu.memory_space<vmem>>, vector<1x16x128xf32>,
    %c0_7 = arith.constant 0 : index
    %c0_8 = arith.constant 0 : index
    %6 = vector.load %arg5[%c0_7, %c0_8] : memref<1x128xf32, #tpu.memory_space<vmem>>, vector<1x128xf32>
    %c0_9 = arith.constant 0 : index
    %c0_10 = arith.constant 0 : index
    %7 = vector.load %arg6[%c0_9, %c0_10] : memref<1x128xf32, #tpu.memory_space<vmem>>, vector<1x128xf32>
    %c0_11 = arith.constant 0 : index
    %c0_12 = arith.constant 0 : index
    %8 = vector.load %arg2[%c0_11, %c0_12] : memref<16x128xf32, #tpu.memory_space<vmem>>, vector<16x128xf32>
    %c0_13 = arith.constant 0 : index
    %c0_14 = arith.constant 0 : index
    %c0_15 = arith.constant 0 : index
    %9 = vector.load %arg8[%c0_13, %c0_14, %c0_15] : memref<1x16x128xf32, #tpu.memory_space<vmem>>, vector<1x16x128xf32>
    %10 = vector.shape_cast %9 : vector<1x16x128xf32> to vector<16x128xf32>
    %c0_16 = arith.constant 0 : index
    %c0_17 = arith.constant 0 : index
    %11 = vector.load %arg4[%c0_16, %c0_17] : memref<128x128xf32, #tpu.memory_space<vmem>>, vector<128x128xf32>
    %cst_18 = arith.constant dense<0.000000e+00> : vector<16x128xf32>
    %12 = tpu.matmul %8, %11, %cst_18 {dimension_numbers = #tpu.dot_dimension_numbers<[1], [0], [0], [1], [0, 0, 1, 1], [], []>} : vector<16x128xf32>, vector<128x128xf32>, vector<16x128xf32> -> vector<16x128xf32>
    %13 = arith.addf %10, %12 : vector<16x128xf32>
    %cst_19 = arith.constant dense<0.000000e+00> : vector<16xf32>
    %14 = vector.multi_reduction <add>, %13, %cst_19 [1] : vector<16x128xf32> to vector<16xf32>
    %15 = vector.shape_cast %14 : vector<16xf32> to vector<16x1xf32>
    %cst_20 = arith.constant 1.280000e+02 : f32
    %16 = vector.broadcast %cst_20 : f32 to vector<16x1xf32>
    %17 = arith.divf %15, %16 : vector<16x1xf32>
    %18 = vector.broadcast %17 : vector<16x1xf32> to vector<16x128xf32>
    %19 = arith.subf %13, %18 : vector<16x128xf32>
    %20 = arith.mulf %19, %19 : vector<16x128xf32>
    %cst_21 = arith.constant dense<0.000000e+00> : vector<16xf32>
    %21 = vector.multi_reduction <add>, %20, %cst_21 [1] : vector<16x128xf32> to vector<16xf32>
    %22 = vector.shape_cast %21 : vector<16xf32> to vector<16x1xf32>
    %cst_22 = arith.constant 1.280000e+02 : f32
    %23 = vector.broadcast %cst_22 : f32 to vector<16x1xf32>
    %24 = arith.divf %22, %23 : vector<16x1xf32>
    %cst_23 = arith.constant 9.99999974E-6 : f32
    %25 = vector.broadcast %cst_23 : f32 to vector<16x1xf32>
    %26 = arith.addf %24, %25 : vector<16x1xf32>
    %27 = math.rsqrt %26 : vector<16x1xf32>
    %28 = vector.broadcast %27 : vector<16x1xf32> to vector<16x128xf32>
    %29 = arith.mulf %19, %28 : vector<16x128xf32>
    %30 = vector.broadcast %6 : vector<1x128xf32> to vector<16x128xf32>
    %31 = arith.mulf %29, %30 : vector<16x128xf32>
    %32 = vector.broadcast %7 : vector<1x128xf32> to vector<16x128xf32>
    %33 = arith.addf %31, %32 : vector<16x128xf32>
    %34 = math.tanh %33 : vector<16x128xf32>
    %c0_24 = arith.constant 0 : index
    %c0_25 = arith.constant 0 : index
    %c0_26 = arith.constant 0 : index
    %35 = vector.load %arg7[%c0_24, %c0_25, %c0_26] : memref<1x16x128xf32, #tpu.memory_space<vmem>>, vector<1x16x128xf32>
    %36 = vector.shape_cast %35 : vector<1x16x128xf32> to vector<16x128xf32>
    %37 = vector.shape_cast %34 : vector<16x128xf32> to vector<1x16x128xf32>
    tpu.vector_store %arg7[%c0_24, %c0_25, %c0_26], %37 {strides = array<i32>} : memref<1x16x128xf32, #tpu.memory_space<vmem>>, vector<1x16x128xf32>,
    return
  }
  func.func @transform_0(%arg0: i32) -> (i32, i32, i32) {
    %c0_i32 = arith.constant 0 : i32
    %c0_i32_0 = arith.constant 0 : i32
    %c0_i32_1 = arith.constant 0 : i32
    return %c0_i32, %arg0, %c0_i32_0 : i32, i32, i32
  }
  func.func @transform_1(%arg0: i32) -> (i32, i32) {
    %c0_i32 = arith.constant 0 : i32
    %c0_i32_0 = arith.constant 0 : i32
    return %arg0, %c0_i32 : i32, i32
  }
  func.func @transform_2(%arg0: i32) -> (i32, i32) {
    %c0_i32 = arith.constant 0 : i32
    %c0_i32_0 = arith.constant 0 : i32
    %c0_i32_1 = arith.constant 0 : i32
    return %c0_i32, %c0_i32_0 : i32, i32
  }
  func.func @transform_3(%arg0: i32) -> (i32, i32) {
    %c0_i32 = arith.constant 0 : i32
    %c0_i32_0 = arith.constant 0 : i32
    %c0_i32_1 = arith.constant 0 : i32
    return %c0_i32, %c0_i32_0 : i32, i32
  }
  func.func @transform_4(%arg0: i32) -> (i32, i32) {
    %c0_i32 = arith.constant 0 : i32
    %c0_i32_0 = arith.constant 0 : i32
    %c0_i32_1 = arith.constant 0 : i32
    return %c0_i32, %c0_i32_0 : i32, i32
  }
  func.func @transform_5(%arg0: i32) -> (i32, i32) {
    %c0_i32 = arith.constant 0 : i32
    %c0_i32_0 = arith.constant 0 : i32
    %c0_i32_1 = arith.constant 0 : i32
    return %c0_i32, %c0_i32_0 : i32, i32
  }
  func.func @transform_6(%arg0: i32) -> (i32, i32, i32) {
    %c0_i32 = arith.constant 0 : i32
    %c0_i32_0 = arith.constant 0 : i32
    %c0_i32_1 = arith.constant 0 : i32
    return %c0_i32, %arg0, %c0_i32_0 : i32, i32, i32
  }
}

</mosaic_0001>

<llo_original>
// kernel: tpu_custom_call.1
$region0: #{tpu_custom_call.1}
  #allocation0 [shape = 'u32[]', space=smem, size = 0x4, offset = 0x4, fixed_abs, tag = 'smem constant byte address 0x4 - core index']
  #allocation1 [shape = 'u32[144,128]{1,0:T(1,128)}', space=vmem, size = 0x12000, scoped, tag = 'internal scratch']
  #allocation2 [shape = 'f32[1,16,128]{2,1,0:T(8,128)}', space=vmem, size = 0x2000, scoped, tag = 'scratch operand']
  %s0 = inlined_call_operand.hbm [shape: f32[1,16,128], index: 0, kind: input, shape index: {}]
  %s1 = inlined_call_operand.hbm [shape: f32[16,128], index: 1, kind: input, shape index: {}]
  %s2 = inlined_call_operand.hbm [shape: f32[128,128], index: 2, kind: input, shape index: {}]
  %s3 = inlined_call_operand.hbm [shape: f32[128,128], index: 3, kind: input, shape index: {}]
  %s4 = inlined_call_operand.vmem [shape: f32[1,128], index: 4, kind: input, shape index: {}]
  %s5 = inlined_call_operand.vmem [shape: f32[1,128], index: 5, kind: input, shape index: {}]
  %s6 = inlined_call_operand.hbm [shape: f32[1,16,128], index: 6, kind: output, shape index: {}]
  %s7 = sld [smem:[#allocation0]]
  $region50: #{tpu_custom_call.1} parent=0
    _
  %s9 = ssub.s32 1, %s7
  %s10 = scalar_select 0, %s9, %s7
  $region1: #{tpu_custom_call.1} parent=0
    #allocation3 [shape = 'u8[8192]{0}', space=vmem, size = 0x2000, scoped, tag = 'input window, operand 0, single buffered']
    #allocation4 [shape = 's32[1]{0}', space=sflag, size = 0x4, scoped, tag = 'scoped memory for tpu_custom_call.1']
    #allocation5 [shape = 's32[1]{0}', space=sflag, size = 0x4, scoped, tag = 'scoped memory for tpu_custom_call.1']
    #allocation6 [shape = 'u8[8192]{0}', space=vmem, size = 0x2000, scoped, tag = 'input window, operand 1, single buffered']
    #allocation7 [shape = 's32[1]{0}', space=sflag, size = 0x4, scoped, tag = 'scoped memory for tpu_custom_call.1']
    #allocation8 [shape = 'u8[65536]{0}', space=vmem, size = 0x10000, scoped, tag = 'input window, operand 2, single buffered']
    #allocation9 [shape = 'u8[65536]{0}', space=vmem, size = 0x10000, scoped, tag = 'input window, operand 3, single buffered']
    #allocation10 [shape = 's32[1]{0}', space=sflag, size = 0x4, scoped, tag = 'scoped memory for tpu_custom_call.1']
    #allocation11 [shape = 'u8[8192]{0}', space=vmem, size = 0x2000, scoped, tag = 'output window, operand 0, single buffered']
    %11 = vsyncpa [#allocation4], 0
    %12 = vsyncpa [#allocation7], 0
    %13 = vsyncpa [#allocation10], 0
    %14 = vsyncpa [#allocation5], 0
    // Predicated region
    $region2: #{tpu_custom_call.1} parent=1 // pred_check
      _
    $region3: #{tpu_custom_call.1} parent=1 // pred_check_branch
      %16 = sbr.rel (0) target = $region5
    $region4: #{tpu_custom_call.1} parent=1 // pred_region
      %s18 = ssub.s32 256, 256
      %19 = vsyncadd [#allocation4], %s18
      %s20 = sshll.u32 [#allocation3], 4
      %s21 = int_to_ptr.vmem [resolvable:$true] %s20
      %26 = dma.hbm_to_vmem [thread:$0]  %s0, 256, %s21, [#allocation4], 128, 128, 8
    $region5: #{tpu_custom_call.1} parent=1 // pred_fallthru
      _
    // Predicated region
    $region6: #{tpu_custom_call.1} parent=1 // pred_check
      _
    $region7: #{tpu_custom_call.1} parent=1 // pred_check_branch
      %28 = sbr.rel (0) target = $region9
    $region8: #{tpu_custom_call.1} parent=1 // pred_region
      %s30 = ssub.s32 256, 256
      %31 = vsyncadd [#allocation7], %s30
      %s32 = sshll.u32 [#allocation6], 4
      %s33 = int_to_ptr.vmem [resolvable:$true] %s32
      %38 = dma.hbm_to_vmem [thread:$0]  %s1, 256, %s33, [#allocation7], 128, 128, 8
    $region9: #{tpu_custom_call.1} parent=1 // pred_fallthru
      _
    // Predicated region
    $region10: #{tpu_custom_call.1} parent=1 // pred_check
      _
    $region11: #{tpu_custom_call.1} parent=1 // pred_check_branch
      %40 = sbr.rel (0) target = $region13
    $region12: #{tpu_custom_call.1} parent=1 // pred_region
      %s42 = ssub.s32 2048, 2048
      %43 = vsyncadd [#allocation7], %s42
      %s44 = sshll.u32 [#allocation8], 4
      %s45 = int_to_ptr.vmem [resolvable:$true] %s44
      %50 = dma.hbm_to_vmem [thread:$0]  %s2, 2048, %s45, [#allocation7], 128, 128, 8
    $region13: #{tpu_custom_call.1} parent=1 // pred_fallthru
      _
    // Predicated region
    $region14: #{tpu_custom_call.1} parent=1 // pred_check
      _
    $region15: #{tpu_custom_call.1} parent=1 // pred_check_branch
      %52 = sbr.rel (0) target = $region17
    $region16: #{tpu_custom_call.1} parent=1 // pred_region
      %s54 = ssub.s32 2048, 2048
      %55 = vsyncadd [#allocation10], %s54
      %s56 = sshll.u32 [#allocation9], 4
      %s57 = int_to_ptr.vmem [resolvable:$true] %s56
      %62 = dma.hbm_to_vmem [thread:$0]  %s3, 2048, %s57, [#allocation10], 128, 128, 8
    $region17: #{tpu_custom_call.1} parent=1 // pred_fallthru
      _
    // Predicated region
    $region18: #{tpu_custom_call.1} parent=1 // pred_check
      _
    $region19: #{tpu_custom_call.1} parent=1 // pred_check_branch
      %64 = sbr.rel (0) target = $region21
    $region20: #{tpu_custom_call.1} parent=1 // pred_region
      _
    $region21: #{tpu_custom_call.1} parent=1 // pred_fallthru
      _
    // Predicated region
    $region22: #{tpu_custom_call.1} parent=1 // pred_check
      _
    $region23: #{tpu_custom_call.1} parent=1 // pred_check_branch
      %66 = sbr.rel (0) target = $region25
    $region24: #{tpu_custom_call.1} parent=1 // pred_region
      _
    $region25: #{tpu_custom_call.1} parent=1 // pred_fallthru
      _
    // Predicated region
    $region26: #{tpu_custom_call.1} parent=1 // pred_check
      _
    $region27: #{tpu_custom_call.1} parent=1 // pred_check_branch
      %68 = sbr.rel (0) target = $region29
    $region28: #{tpu_custom_call.1} parent=1 // pred_region
      %69 = dma.done [#allocation4], 256
    $region29: #{tpu_custom_call.1} parent=1 // pred_fallthru
      _
    // Predicated region
    $region30: #{tpu_custom_call.1} parent=1 // pred_check
      _
    $region31: #{tpu_custom_call.1} parent=1 // pred_check_branch
      %71 = sbr.rel (0) target = $region33
    $region32: #{tpu_custom_call.1} parent=1 // pred_region
      %72 = dma.done [#allocation7], 256
    $region33: #{tpu_custom_call.1} parent=1 // pred_fallthru
      _
    // Predicated region
    $region34: #{tpu_custom_call.1} parent=1 // pred_check
      _
    $region35: #{tpu_custom_call.1} parent=1 // pred_check_branch
      %74 = sbr.rel (0) target = $region37
    $region36: #{tpu_custom_call.1} parent=1 // pred_region
      %75 = dma.done [#allocation7], 2048
    $region37: #{tpu_custom_call.1} parent=1 // pred_fallthru
      _
    // Predicated region
    $region38: #{tpu_custom_call.1} parent=1 // pred_check
      _
    $region39: #{tpu_custom_call.1} parent=1 // pred_check_branch
      %77 = sbr.rel (0) target = $region41
    $region40: #{tpu_custom_call.1} parent=1 // pred_region
      %78 = dma.done [#allocation10], 2048
    $region41: #{tpu_custom_call.1} parent=1 // pred_fallthru
      _
    %v79 = vld [vmem:[#allocation3] sm:$0xff]
    %v80 = vld [vmem:[#allocation3 + $0x8] sm:$0xff]
    %v81 = vld [vmem:[#allocation8] sm:$0xff]
    %v82 = vld [vmem:[#allocation8 + $0x8] sm:$0xff]
    %v83 = vld [vmem:[#allocation8 + $0x10] sm:$0xff]
    %v84 = vld [vmem:[#allocation8 + $0x18] sm:$0xff]
    %v85 = vld [vmem:[#allocation8 + $0x20] sm:$0xff]
    %v86 = vld [vmem:[#allocation8 + $0x28] sm:$0xff]
    %v87 = vld [vmem:[#allocation8 + $0x30] sm:$0xff]
    %v88 = vld [vmem:[#allocation8 + $0x38] sm:$0xff]
    %v89 = vld [vmem:[#allocation8 + $0x40] sm:$0xff]
    %v90 = vld [vmem:[#allocation8 + $0x48] sm:$0xff]
    %v91 = vld [vmem:[#allocation8 + $0x50] sm:$0xff]
    %v92 = vld [vmem:[#allocation8 + $0x58] sm:$0xff]
    %v93 = vld [vmem:[#allocation8 + $0x60] sm:$0xff]
    %v94 = vld [vmem:[#allocation8 + $0x68] sm:$0xff]
    %v95 = vld [vmem:[#allocation8 + $0x70] sm:$0xff]
    %v96 = vld [vmem:[#allocation8 + $0x78] sm:$0xff]
    %97 = vmatprep.subr.mxu0 0.0
    %98 = vmatpush1.msra.mxu0 %v96
    %99 = vmatprep.subr.mxu0 0.0
    %100 = vmatpush1.msra.mxu0 %v95
    %101 = vmatprep.subr.mxu0 0.0
    %102 = vmatpush1.msra.mxu0 %v94
    %103 = vmatprep.subr.mxu0 0.0
    %104 = vmatpush1.msra.mxu0 %v93
    %105 = vmatprep.subr.mxu0 0.0
    %106 = vmatpush1.msra.mxu0 %v92
    %107 = vmatprep.subr.mxu0 0.0
    %108 = vmatpush1.msra.mxu0 %v91
    %109 = vmatprep.subr.mxu0 0.0
    %110 = vmatpush1.msra.mxu0 %v90
    %111 = vmatprep.subr.mxu0 0.0
    %112 = vmatpush1.msra.mxu0 %v89
    %113 = vmatprep.subr.mxu0 0.0
    %114 = vmatpush1.msra.mxu0 %v88
    %115 = vmatprep.subr.mxu0 0.0
    %116 = vmatpush1.msra.mxu0 %v87
    %117 = vmatprep.subr.mxu0 0.0
    %118 = vmatpush1.msra.mxu0 %v86
    %119 = vmatprep.subr.mxu0 0.0
    %120 = vmatpush1.msra.mxu0 %v85
    %121 = vmatprep.subr.mxu0 0.0
    %122 = vmatpush1.msra.mxu0 %v84
    %123 = vmatprep.subr.mxu0 0.0
    %124 = vmatpush1.msra.mxu0 %v83
    %125 = vmatprep.subr.mxu0 0.0
    %126 = vmatpush1.msra.mxu0 %v82
    %127 = vmatprep.subr.mxu0 0.0
    %128 = vmatpush1.msra.mxu0 %v81
    %129 = vmatprep.subr.mxu0 0.0
    %130 = vmatpush2.msra.mxu0 0.0
    %131 = vmatprep.subr.mxu0 0.0
    %132 = vmatpush2.msra.mxu0 0.0
    %133 = vmatprep.subr.mxu0 0.0
    %134 = vmatpush2.msra.mxu0 0.0
    %135 = vmatprep.subr.mxu0 0.0
    %136 = vmatpush2.msra.mxu0 0.0
    %137 = vmatprep.subr.mxu0 0.0
    %138 = vmatpush2.msra.mxu0 0.0
    %139 = vmatprep.subr.mxu0 0.0
    %140 = vmatpush2.msra.mxu0 0.0
    %141 = vmatprep.subr.mxu0 0.0
    %142 = vmatpush2.msra.mxu0 0.0
    %143 = vmatprep.subr.mxu0 0.0
    %144 = vmatpush2.msra.mxu0 0.0
    %145 = vmatprep.subr.mxu0 0.0
    %146 = vmatpush2.msra.mxu0 0.0
    %147 = vmatprep.subr.mxu0 0.0
    %148 = vmatpush2.msra.mxu0 0.0
    %149 = vmatprep.subr.mxu0 0.0
    %150 = vmatpush2.msra.mxu0 0.0
    %151 = vmatprep.subr.mxu0 0.0
    %152 = vmatpush2.msra.mxu0 0.0
    %153 = vmatprep.subr.mxu0 0.0
    %154 = vmatpush2.msra.mxu0 0.0
    %155 = vmatprep.subr.mxu0 0.0
    %156 = vmatpush2.msra.mxu0 0.0
    %157 = vmatprep.subr.mxu0 0.0
    %158 = vmatpush2.msra.mxu0 0.0
    %159 = vmatprep.subr.mxu0 0.0
    %160 = vmatpush2.msra.mxu0 0.0
    %161 = vmatprep.mubr.f32.mxu0 0.0
    %162 = vmatmul.mubr.f32.gmra.mxu0 %v79
    %v163 = vpop.f32.mrf.mxu0
    %v164 = vadd.f32 0.0, %v163
    %v165 = vpop.f32.mrf.mxu0
    %166 = vmatprep.mubr.f32.mxu0 0.0
    %167 = vmatmul.mubr.f32.gmra.mxu0 %v80
    %v168 = vpop.f32.mrf.mxu0
    %v169 = vadd.f32 0.0, %v168
    %v170 = vpop.f32.mrf.mxu0
    %171 = vdwg.mxu0
    %172 = vst [vmem:[#allocation2] sm:$0xff] %v164
    %173 = vst [vmem:[#allocation2 + $0x8] sm:$0xff] %v169
    %v174 = vld [vmem:[%s4] sm:$0x1]
    %v175 = vld [vmem:[%s5] sm:$0x1]
    %v176 = vld [vmem:[#allocation6] sm:$0xff]
    %v177 = vld [vmem:[#allocation6 + $0x8] sm:$0xff]
    %v178 = vld [vmem:[#allocation2] sm:$0xff]
    %v179 = vld [vmem:[#allocation2 + $0x8] sm:$0xff]
    %v180 = vld [vmem:[#allocation9] sm:$0xff]
    %v181 = vld [vmem:[#allocation9 + $0x8] sm:$0xff]
    %v182 = vld [vmem:[#allocation9 + $0x10] sm:$0xff]
    %v183 = vld [vmem:[#allocation9 + $0x18] sm:$0xff]
    %v184 = vld [vmem:[#allocation9 + $0x20] sm:$0xff]
    %v185 = vld [vmem:[#allocation9 + $0x28] sm:$0xff]
    %v186 = vld [vmem:[#allocation9 + $0x30] sm:$0xff]
    %v187 = vld [vmem:[#allocation9 + $0x38] sm:$0xff]
    %v188 = vld [vmem:[#allocation9 + $0x40] sm:$0xff]
    %v189 = vld [vmem:[#allocation9 + $0x48] sm:$0xff]
    %v190 = vld [vmem:[#allocation9 + $0x50] sm:$0xff]
    %v191 = vld [vmem:[#allocation9 + $0x58] sm:$0xff]
    %v192 = vld [vmem:[#allocation9 + $0x60] sm:$0xff]
    %v193 = vld [vmem:[#allocation9 + $0x68] sm:$0xff]
    %v194 = vld [vmem:[#allocation9 + $0x70] sm:$0xff]
    %v195 = vld [vmem:[#allocation9 + $0x78] sm:$0xff]
    %196 = vmatprep.subr.mxu0 0.0
    %197 = vmatpush1.msra.mxu0 %v195
    %198 = vmatprep.subr.mxu0 0.0
    %199 = vmatpush1.msra.mxu0 %v194
    %200 = vmatprep.subr.mxu0 0.0
    %201 = vmatpush1.msra.mxu0 %v193
    %202 = vmatprep.subr.mxu0 0.0
    %203 = vmatpush1.msra.mxu0 %v192
    %204 = vmatprep.subr.mxu0 0.0
    %205 = vmatpush1.msra.mxu0 %v191
    %206 = vmatprep.subr.mxu0 0.0
    %207 = vmatpush1.msra.mxu0 %v190
    %208 = vmatprep.subr.mxu0 0.0
    %209 = vmatpush1.msra.mxu0 %v189
    %210 = vmatprep.subr.mxu0 0.0
    %211 = vmatpush1.msra.mxu0 %v188
    %212 = vmatprep.subr.mxu0 0.0
    %213 = vmatpush1.msra.mxu0 %v187
    %214 = vmatprep.subr.mxu0 0.0
    %215 = vmatpush1.msra.mxu0 %v186
    %216 = vmatprep.subr.mxu0 0.0
    %217 = vmatpush1.msra.mxu0 %v185
    %218 = vmatprep.subr.mxu0 0.0
    %219 = vmatpush1.msra.mxu0 %v184
    %220 = vmatprep.subr.mxu0 0.0
    %221 = vmatpush1.msra.mxu0 %v183
    %222 = vmatprep.subr.mxu0 0.0
    %223 = vmatpush1.msra.mxu0 %v182
    %224 = vmatprep.subr.mxu0 0.0
    %225 = vmatpush1.msra.mxu0 %v181
    %226 = vmatprep.subr.mxu0 0.0
    %227 = vmatpush1.msra.mxu0 %v180
    %228 = vmatprep.subr.mxu0 0.0
    %229 = vmatpush2.msra.mxu0 0.0
    %230 = vmatprep.subr.mxu0 0.0
    %231 = vmatpush2.msra.mxu0 0.0
    %232 = vmatprep.subr.mxu0 0.0
    %233 = vmatpush2.msra.mxu0 0.0
    %234 = vmatprep.subr.mxu0 0.0
    %235 = vmatpush2.msra.mxu0 0.0
    %236 = vmatprep.subr.mxu0 0.0
    %237 = vmatpush2.msra.mxu0 0.0
    %238 = vmatprep.subr.mxu0 0.0
    %239 = vmatpush2.msra.mxu0 0.0
    %240 = vmatprep.subr.mxu0 0.0
    %241 = vmatpush2.msra.mxu0 0.0
    %242 = vmatprep.subr.mxu0 0.0
    %243 = vmatpush2.msra.mxu0 0.0
    %244 = vmatprep.subr.mxu0 0.0
    %245 = vmatpush2.msra.mxu0 0.0
    %246 = vmatprep.subr.mxu0 0.0
    %247 = vmatpush2.msra.mxu0 0.0
    %248 = vmatprep.subr.mxu0 0.0
    %249 = vmatpush2.msra.mxu0 0.0
    %250 = vmatprep.subr.mxu0 0.0
    %251 = vmatpush2.msra.mxu0 0.0
    %252 = vmatprep.subr.mxu0 0.0
    %253 = vmatpush2.msra.mxu0 0.0
    %254 = vmatprep.subr.mxu0 0.0
    %255 = vmatpush2.msra.mxu0 0.0
    %256 = vmatprep.subr.mxu0 0.0
    %257 = vmatpush2.msra.mxu0 0.0
    %258 = vmatprep.subr.mxu0 0.0
    %259 = vmatpush2.msra.mxu0 0.0
    %260 = vmatprep.mubr.f32.mxu0 0.0
    %261 = vmatmul.mubr.f32.gmra.mxu0 %v176
    %v262 = vpop.f32.mrf.mxu0
    %v263 = vadd.f32 0.0, %v262
    %v264 = vpop.f32.mrf.mxu0
    %265 = vmatprep.mubr.f32.mxu0 0.0
    %266 = vmatmul.mubr.f32.gmra.mxu0 %v177
    %v267 = vpop.f32.mrf.mxu0
    %v268 = vadd.f32 0.0, %v267
    %v269 = vpop.f32.mrf.mxu0
    %270 = vdwg.mxu0
    %v271 = vadd.f32 %v178, %v263
    %v272 = vadd.f32 %v179, %v268
    %273 = vadd.xlane.f32.xlu0 %v271
    %v274 = vpop.xlane.xlu0 %273
    %275 = vadd.xlane.f32.xlu0 %v272
    %v276 = vpop.xlane.xlu0 %275
    %v277 = vrcp.pop 128.0
    %v278 = vmul.f32 %v274, %v277
    %v279 = vmul.f32 %v276, %v277
    %v280 = vsub.f32 %v271, %v278
    %v281 = vsub.f32 %v272, %v279
    %v282 = vmul.f32 %v280, %v280
    %v283 = vmul.f32 %v281, %v281
    %284 = vadd.xlane.f32.xlu0 %v282
    %v285 = vpop.xlane.xlu0 %284
    %286 = vadd.xlane.f32.xlu0 %v283
    %v287 = vpop.xlane.xlu0 %286
    %v288 = vmul.f32 %v285, %v277
    %v289 = vmul.f32 %v287, %v277
    %v290 = vadd.f32 %v288, 1e-05
    %v291 = vadd.f32 %v289, 1e-05
    %v292 = vrsqrt.pop %v290
    %v293 = vrsqrt.pop %v291
    %v294 = vmul.f32 %v280, %v292
    %v295 = vmul.f32 %v281, %v293
    %v297 = vlaneseq
    %v298 = vshrl.u32 %v297, 7
    %v299 = vsub.s32 0, %v298
    %v300 = vrot.slane %v174, %v299
    %v302 = vmul.f32 %v294, %v300
    %v303 = vmul.f32 %v295, %v300
    %v305 = vlaneseq
    %v306 = vshrl.u32 %v305, 7
    %v307 = vsub.s32 0, %v306
    %v308 = vrot.slane %v175, %v307
    %v310 = vadd.f32 %v302, %v308
    %v311 = vadd.f32 %v303, %v308
    %v312 = vtanh.pop %v310
    %v313 = vtanh.pop %v311
    %314 = vst [vmem:[#allocation11] sm:$0xff] %v312
    %315 = vst [vmem:[#allocation11 + $0x8] sm:$0xff] %v313
    // Predicated region
    $region42: #{tpu_custom_call.1} parent=1 // pred_check
      _
    $region43: #{tpu_custom_call.1} parent=1 // pred_check_branch
      %317 = sbr.rel (0) target = $region45
    $region44: #{tpu_custom_call.1} parent=1 // pred_region
      %s319 = ssub.s32 256, 256
      %320 = vsyncadd [#allocation5], %s319
      %s321 = sshll.u32 [#allocation11], 4
      %s322 = int_to_ptr.vmem [resolvable:$true] %s321
      %327 = dma.vmem_to_hbm [thread:$0]  %s322, 256, %s6, [#allocation5], 128, 128, 8
    $region45: #{tpu_custom_call.1} parent=1 // pred_fallthru
      _
    // Predicated region
    $region46: #{tpu_custom_call.1} parent=1 // pred_check
      _
    $region47: #{tpu_custom_call.1} parent=1 // pred_check_branch
      %329 = sbr.rel (0) target = $region49
    $region48: #{tpu_custom_call.1} parent=1 // pred_region
      %330 = dma.done [#allocation5], 256
    $region49: #{tpu_custom_call.1} parent=1 // pred_fallthru
      _
    %331 = vsyncpa [#allocation4], 1
    %332 = vsyncpa [#allocation7], 1
    %333 = vsyncpa [#allocation10], 1
    %334 = vsyncpa [#allocation5], 1

</llo_original>
